<compile_context>
chip_gen: v7x
topology: tpu7x:2x2x1
jax: 0.10.0
libtpu: 0.0.40
codegen_flags: <defaults>
</compile_context>

<pallas_src>
import functools

import jax
import jax.numpy as jnp
from jax.experimental import pallas as pl
from jax.experimental.pallas import tpu as pltpu

LN_EPS = 1e-5  # torch.nn.LayerNorm default


def _projector_kernel(x_ref, w1_ref, b1_ref, w2_ref, b2_ref, g_ref, bb_ref,
                      o_ref, *, tokens, C):
    """One (head, column-tile) grid step.

    x_ref : (B, Din)  f32    per-head input (resident across column tiles)
    w1_ref: (Din, K)  bf16   shared proj_in weight (resident across whole grid)
    b1_ref: (1, K)    f32
    w2_ref: (K, TN)   bf16   streamed column tile of this head's proj weight
    b2_ref: (1, TN)   f32
    g_ref : (1, C)    f32    LayerNorm gamma for this head
    bb_ref: (1, C)    f32    LayerNorm beta for this head
    o_ref : (B, TN)   f32    lane-dense output tile, TN = tokens * C
    """
    # proj_in. Recomputed per column tile: B is tiny so this is negligible and it
    # keeps every grid axis independent -> both axes can be marked "parallel".
    x = x_ref[...].astype(jnp.bfloat16)
    h = jnp.dot(x, w1_ref[...], preferred_element_type=jnp.float32) + b1_ref[...]

    # Head projection for this column tile -> (B, TN) in f32.
    y = jnp.dot(h.astype(jnp.bfloat16), w2_ref[...],
                preferred_element_type=jnp.float32) + b2_ref[...]

    gamma = g_ref[...]   # (1, C) — hoisted out of the token loop
    beta = bb_ref[...]

    # Per-token LayerNorm over C. With C a multiple of 128 the slices are whole
    # vregs along the lane axis, so loads/stores stay lane-dense and unmasked.
    for t in range(tokens):
        sl = slice(t * C, (t + 1) * C)
        yt = y[:, sl]
        mean = jnp.mean(yt, axis=-1, keepdims=True)
        cent = yt - mean
        var = jnp.mean(cent * cent, axis=-1, keepdims=True)
        yn = cent * jax.lax.rsqrt(var + LN_EPS)
        o_ref[:, sl] = (yn * gamma + beta).astype(o_ref.dtype)


def _choose_col_tile_tokens(T, C, K, *, weight_bytes=2,
                            w2_tile_budget_bytes=12 * 1024 * 1024,
                            max_lanes=2048):
    """Largest whole-token column tile whose lane width is a multiple of 128 and
    whose double-buffered W2 tile fits a conservative VMEM budget (safe for the
    64 MiB physical / 32 MiB default-scoped VMEM on v7x)."""
    legal = [t for t in range(1, T + 1)
             if T % t == 0 and ((t * C) % 128 == 0 or t == T)]

    def w2_tile_bytes(t):  # the double-buffered W2 tile dominates VMEM use
        return 2 * K * t * C * weight_bytes

    fitting = [t for t in legal
               if w2_tile_bytes(t) <= w2_tile_budget_bytes and t * C <= max_lanes]
    return max(fitting) if fitting else min(legal)


def make_projector_params(key, input_embedding_dim, clip_embeddings_dim,
                          cross_attention_dim, clip_extra_context_tokens):
    """Deterministic synthetic parameters (shapes match the PyTorch module)."""
    T, C = clip_extra_context_tokens, cross_attention_dim
    k1, k2, k3, k4, k5, k6 = jax.random.split(key, 6)

    params = {
        # proj_in: torch.nn.init.constant_(weight, 1), constant_(bias, 0)
        "proj_in_w": jnp.ones((input_embedding_dim, clip_embeddings_dim), jnp.float32),
        "proj_in_b": jnp.zeros((1, clip_embeddings_dim), jnp.float32),
    }
    for name, (kw, kb) in (("object", (k1, k2)), ("others", (k3, k4))):
        params[f"{name}_proj_w"] = (
            jax.random.normal(kw, (clip_embeddings_dim, T * C), jnp.float32) * 0.02)
        params[f"{name}_proj_b"] = (
            jax.random.normal(kb, (1, T * C), jnp.float32) * 0.02)
        params[f"{name}_ln_g"] = jnp.ones((1, C), jnp.float32)
        params[f"{name}_ln_b"] = jnp.zeros((1, C), jnp.float32)
    # (k5, k6 unused; kept so the split count is stable)
    return params


def projector_forward(params, image_embeds, *, cross_attention_dim,
                      clip_extra_context_tokens, col_tile_tokens=None):
    """image_embeds: [B, 2, Din] -> (object [B,T,C], others [B,T,C])."""
    T, C = clip_extra_context_tokens, cross_attention_dim
    B, H, Din = image_embeds.shape
    assert H == 2, "Projector expects image_embeds[:, 0] and image_embeds[:, 1]"
    K = params["proj_in_w"].shape[1]
    TC = T * C

    # Pack per-head parameters along a leading head axis; stream matmul weights in
    # bf16 (halves HBM bytes of the dominant W2 traffic; MXU-native input dtype).
    # Biases / LN params / accumulation stay f32.
    w1 = params["proj_in_w"].astype(jnp.bfloat16)                       # (Din, K)
    b1 = params["proj_in_b"]                                            # (1, K)
    w2 = jnp.stack([params["object_proj_w"],
                    params["others_proj_w"]]).astype(jnp.bfloat16)      # (2, K, TC)
    b2 = jnp.stack([params["object_proj_b"], params["others_proj_b"]])  # (2, 1, TC)
    g = jnp.stack([params["object_ln_g"], params["others_ln_g"]])       # (2, 1, C)
    bb = jnp.stack([params["object_ln_b"], params["others_ln_b"]])      # (2, 1, C)

    xs = jnp.transpose(image_embeds, (1, 0, 2))                         # (2, B, Din)

    t_tile = (col_tile_tokens if col_tile_tokens is not None
              else _choose_col_tile_tokens(T, C, K))
    assert T % t_tile == 0
    tn = t_tile * C
    n_col = TC // tn

    kernel = functools.partial(_projector_kernel, tokens=t_tile, C=C)

    cost = pl.CostEstimate(
        flops=2 * H * B * (Din * K + K * TC),
        transcendentals=H * B * T,
        bytes_accessed=(xs.size * 4 + w1.size * 2 + b1.size * 4 + w2.size * 2
                        + b2.size * 4 + g.size * 4 + bb.size * 4 + H * B * TC * 4),
    )

    out = pl.pallas_call(
        kernel,
        out_shape=jax.ShapeDtypeStruct((H, B, TC), jnp.float32),
        grid=(H, n_col),
        in_specs=[
            pl.BlockSpec((None, B, Din), lambda h, j: (h, 0, 0)),  # x (per head)
            pl.BlockSpec((Din, K),       lambda h, j: (0, 0)),     # W1 (resident)
            pl.BlockSpec((1, K),         lambda h, j: (0, 0)),     # b1 (resident)
            pl.BlockSpec((None, K, tn),  lambda h, j: (h, 0, j)),  # W2 tile (streamed)
            pl.BlockSpec((None, 1, tn),  lambda h, j: (h, 0, j)),  # b2 tile
            pl.BlockSpec((None, 1, C),   lambda h, j: (h, 0, 0)),  # gamma
            pl.BlockSpec((None, 1, C),   lambda h, j: (h, 0, 0)),  # beta
        ],
        out_specs=pl.BlockSpec((None, B, tn), lambda h, j: (h, 0, j)),
        compiler_params=pltpu.CompilerParams(
            dimension_semantics=("parallel", "parallel"),
            vmem_limit_bytes=48 * 1024 * 1024),
        cost_estimate=cost,
    )(xs, w1, b1, w2, b2, g, bb)

    out = out.reshape(H, B, T, C)
    return out[0], out[1]


def _reference(params, image_embeds, T, C):
    """Plain-JAX reference mirroring the kernel's bf16-weight / f32-accumulate policy."""
    w1 = params["proj_in_w"].astype(jnp.bfloat16)
    outs = []
    for i, name in enumerate(("object", "others")):
        x = image_embeds[:, i].astype(jnp.bfloat16)
        h = jnp.dot(x, w1, preferred_element_type=jnp.float32) + params["proj_in_b"]
        w2 = params[f"{name}_proj_w"].astype(jnp.bfloat16)
        y = jnp.dot(h.astype(jnp.bfloat16), w2,
                    preferred_element_type=jnp.float32) + params[f"{name}_proj_b"]
        y = y.reshape(-1, T, C)
        mean = y.mean(-1, keepdims=True)
        var = ((y - mean) ** 2).mean(-1, keepdims=True)
        yn = (y - mean) * jax.lax.rsqrt(var + LN_EPS)
        outs.append(yn * params[f"{name}_ln_g"].reshape(1, 1, C)
                    + params[f"{name}_ln_b"].reshape(1, 1, C))
    return outs[0], outs[1]


if __name__ == "__main__":
    # Small, lane-aligned shapes consistent with the module's forward.
    B = 2
    input_embedding_dim = 128
    clip_embeddings_dim = 256
    cross_attention_dim = 128
    clip_extra_context_tokens = 4

    key = jax.random.PRNGKey(0)
    k_params, k_x = jax.random.split(key)

    params = make_projector_params(
        k_params, input_embedding_dim, clip_embeddings_dim,
        cross_attention_dim, clip_extra_context_tokens)
    image_embeds = jax.random.normal(k_x, (B, 2, input_embedding_dim), jnp.float32)

    # Auto-chosen column tile (single tile at these small shapes).
    fwd = jax.jit(functools.partial(
        projector_forward,
        cross_attention_dim=cross_attention_dim,
        clip_extra_context_tokens=clip_extra_context_tokens))
    out_obj, out_oth = fwd(params, image_embeds)

    # Explicit 2-tokens-per-tile -> exercises the multi-column-tile streaming path.
    fwd_tiled = jax.jit(functools.partial(
        projector_forward,
        cross_attention_dim=cross_attention_dim,
        clip_extra_context_tokens=clip_extra_context_tokens,
        col_tile_tokens=2))
    out_obj_t, out_oth_t = fwd_tiled(params, image_embeds)

    jax.block_until_ready((out_obj, out_oth, out_obj_t, out_oth_t))

    ref_obj, ref_oth = _reference(params, image_embeds,
                                  clip_extra_context_tokens, cross_attention_dim)

    T, C = clip_extra_context_tokens, cross_attention_dim
    for o in (out_obj, out_oth, out_obj_t, out_oth_t):
        assert o.shape == (B, T, C)
    assert jnp.allclose(out_obj, ref_obj, atol=2e-3, rtol=2e-3)
    assert jnp.allclose(out_oth, ref_oth, atol=2e-3, rtol=2e-3)
    assert jnp.allclose(out_obj_t, ref_obj, atol=2e-3, rtol=2e-3)
    assert jnp.allclose(out_oth_t, ref_oth, atol=2e-3, rtol=2e-3)

    print("KERNEL_OK")
</pallas_src>

<mosaic_0001>
module attributes {stable_mosaic.version = 11 : i64} {
  func.func @_projector_kernel(%arg0: i32, %arg1: i32, %arg2: memref<1x2x128xf32, #tpu.memory_space<vmem>>, %arg3: memref<128x256xbf16, #tpu.memory_space<vmem>>, %arg4: memref<1x256xf32, #tpu.memory_space<vmem>>, %arg5: memref<1x256x512xbf16, #tpu.memory_space<vmem>>, %arg6: memref<1x1x512xf32, #tpu.memory_space<vmem>>, %arg7: memref<1x1x128xf32, #tpu.memory_space<vmem>>, %arg8: memref<1x1x128xf32, #tpu.memory_space<vmem>>, %arg9: memref<1x2x512xf32, #tpu.memory_space<vmem>>) attributes {dimension_semantics = [#tpu.dimension_semantics<parallel>, #tpu.dimension_semantics<parallel>], iteration_bounds = array<i64: 2, 1>, scalar_prefetch = 0 : i64, scratch_operands = 0 : i64, tpu.core_type = #tpu.core_type<tc>, window_params = [{transform_indices = @transform_0, window_bounds = array<i64: 1, 2, 128>}, {pipeline_mode = #tpu.pipeline_mode<synchronous>, transform_indices = @transform_1, window_bounds = array<i64: 128, 256>}, {pipeline_mode = #tpu.pipeline_mode<synchronous>, transform_indices = @transform_2, window_bounds = array<i64: 1, 256>}, {transform_indices = @transform_3, window_bounds = array<i64: 1, 256, 512>}, {transform_indices = @transform_4, window_bounds = array<i64: 1, 1, 512>}, {transform_indices = @transform_5, window_bounds = array<i64: 1, 1, 128>}, {transform_indices = @transform_6, window_bounds = array<i64: 1, 1, 128>}, {transform_indices = @transform_7, window_bounds = array<i64: 1, 2, 512>}]} {
    %c0 = arith.constant 0 : index
    %c0_0 = arith.constant 0 : index
    %c0_1 = arith.constant 0 : index
    %0 = vector.load %arg2[%c0, %c0_0, %c0_1] : memref<1x2x128xf32, #tpu.memory_space<vmem>>, vector<1x2x128xf32>
    %1 = vector.shape_cast %0 : vector<1x2x128xf32> to vector<2x128xf32>
    %2 = arith.truncf %1 : vector<2x128xf32> to vector<2x128xbf16>
    %c0_2 = arith.constant 0 : index
    %c0_3 = arith.constant 0 : index
    %3 = vector.load %arg3[%c0_2, %c0_3] : memref<128x256xbf16, #tpu.memory_space<vmem>>, vector<128x256xbf16>
    %cst = arith.constant dense<0.000000e+00> : vector<2x256xf32>
    %4 = tpu.matmul %2, %3, %cst {dimension_numbers = #tpu.dot_dimension_numbers<[1], [0], [0], [1], [0, 0, 1, 1], [], []>} : vector<2x128xbf16>, vector<128x256xbf16>, vector<2x256xf32> -> vector<2x256xf32>
    %c0_4 = arith.constant 0 : index
    %c0_5 = arith.constant 0 : index
    %5 = vector.load %arg4[%c0_4, %c0_5] : memref<1x256xf32, #tpu.memory_space<vmem>>, vector<1x256xf32>
    %6 = vector.broadcast %5 : vector<1x256xf32> to vector<2x256xf32>
    %7 = arith.addf %4, %6 : vector<2x256xf32>
    %8 = arith.truncf %7 : vector<2x256xf32> to vector<2x256xbf16>
    %c0_6 = arith.constant 0 : index
    %c0_7 = arith.constant 0 : index
    %c0_8 = arith.constant 0 : index
    %9 = vector.load %arg5[%c0_6, %c0_7, %c0_8] : memref<1x256x512xbf16, #tpu.memory_space<vmem>>, vector<1x256x512xbf16>
    %10 = vector.shape_cast %9 : vector<1x256x512xbf16> to vector<256x512xbf16>
    %cst_9 = arith.constant dense<0.000000e+00> : vector<2x512xf32>
    %11 = tpu.matmul %8, %10, %cst_9 {dimension_numbers = #tpu.dot_dimension_numbers<[1], [0], [0], [1], [0, 0, 1, 1], [], []>} : vector<2x256xbf16>, vector<256x512xbf16>, vector<2x512xf32> -> vector<2x512xf32>
    %c0_10 = arith.constant 0 : index
    %c0_11 = arith.constant 0 : index
    %c0_12 = arith.constant 0 : index
    %12 = vector.load %arg6[%c0_10, %c0_11, %c0_12] : memref<1x1x512xf32, #tpu.memory_space<vmem>>, vector<1x1x512xf32>
    %13 = vector.shape_cast %12 : vector<1x1x512xf32> to vector<1x512xf32>
    %14 = vector.broadcast %13 : vector<1x512xf32> to vector<2x512xf32>
    %15 = arith.addf %11, %14 : vector<2x512xf32>
    %c0_13 = arith.constant 0 : index
    %c0_14 = arith.constant 0 : index
    %c0_15 = arith.constant 0 : index
    %16 = vector.load %arg7[%c0_13, %c0_14, %c0_15] : memref<1x1x128xf32, #tpu.memory_space<vmem>>, vector<1x1x128xf32>
    %17 = vector.shape_cast %16 : vector<1x1x128xf32> to vector<1x128xf32>
    %c0_16 = arith.constant 0 : index
    %c0_17 = arith.constant 0 : index
    %c0_18 = arith.constant 0 : index
    %18 = vector.load %arg8[%c0_16, %c0_17, %c0_18] : memref<1x1x128xf32, #tpu.memory_space<vmem>>, vector<1x1x128xf32>
    %19 = vector.shape_cast %18 : vector<1x1x128xf32> to vector<1x128xf32>
    %20 = vector.extract_strided_slice %15 {offsets = [0, 0], sizes = [2, 128], strides = [1, 1]} : vector<2x512xf32> to vector<2x128xf32>
    %cst_19 = arith.constant dense<0.000000e+00> : vector<2xf32>
    %21 = vector.multi_reduction <add>, %20, %cst_19 [1] : vector<2x128xf32> to vector<2xf32>
    %22 = vector.shape_cast %21 : vector<2xf32> to vector<2x1xf32>
    %cst_20 = arith.constant 1.280000e+02 : f32
    %23 = vector.broadcast %cst_20 : f32 to vector<2x1xf32>
    %24 = arith.divf %22, %23 : vector<2x1xf32>
    %25 = vector.broadcast %24 : vector<2x1xf32> to vector<2x128xf32>
    %26 = arith.subf %20, %25 : vector<2x128xf32>
    %27 = arith.mulf %26, %26 : vector<2x128xf32>
    %cst_21 = arith.constant dense<0.000000e+00> : vector<2xf32>
    %28 = vector.multi_reduction <add>, %27, %cst_21 [1] : vector<2x128xf32> to vector<2xf32>
    %29 = vector.shape_cast %28 : vector<2xf32> to vector<2x1xf32>
    %cst_22 = arith.constant 1.280000e+02 : f32
    %30 = vector.broadcast %cst_22 : f32 to vector<2x1xf32>
    %31 = arith.divf %29, %30 : vector<2x1xf32>
    %cst_23 = arith.constant 9.99999974E-6 : f32
    %32 = vector.broadcast %cst_23 : f32 to vector<2x1xf32>
    %33 = arith.addf %31, %32 : vector<2x1xf32>
    %34 = math.rsqrt %33 : vector<2x1xf32>
    %35 = vector.broadcast %34 : vector<2x1xf32> to vector<2x128xf32>
    %36 = arith.mulf %26, %35 : vector<2x128xf32>
    %37 = vector.broadcast %17 : vector<1x128xf32> to vector<2x128xf32>
    %38 = arith.mulf %36, %37 : vector<2x128xf32>
    %39 = vector.broadcast %19 : vector<1x128xf32> to vector<2x128xf32>
    %40 = arith.addf %38, %39 : vector<2x128xf32>
    %c0_24 = arith.constant 0 : index
    %c0_25 = arith.constant 0 : index
    %c0_26 = arith.constant 0 : index
    %41 = vector.load %arg9[%c0_24, %c0_25, %c0_26] : memref<1x2x512xf32, #tpu.memory_space<vmem>>, vector<1x2x128xf32>
    %42 = vector.shape_cast %41 : vector<1x2x128xf32> to vector<2x128xf32>
    %43 = vector.shape_cast %40 : vector<2x128xf32> to vector<1x2x128xf32>
    tpu.vector_store %arg9[%c0_24, %c0_25, %c0_26], %43 {strides = array<i32>} : memref<1x2x512xf32, #tpu.memory_space<vmem>>, vector<1x2x128xf32>,
    %44 = vector.extract_strided_slice %15 {offsets = [0, 128], sizes = [2, 128], strides = [1, 1]} : vector<2x512xf32> to vector<2x128xf32>
    %cst_27 = arith.constant dense<0.000000e+00> : vector<2xf32>
    %45 = vector.multi_reduction <add>, %44, %cst_27 [1] : vector<2x128xf32> to vector<2xf32>
    %46 = vector.shape_cast %45 : vector<2xf32> to vector<2x1xf32>
    %cst_28 = arith.constant 1.280000e+02 : f32
    %47 = vector.broadcast %cst_28 : f32 to vector<2x1xf32>
    %48 = arith.divf %46, %47 : vector<2x1xf32>
    %49 = vector.broadcast %48 : vector<2x1xf32> to vector<2x128xf32>
    %50 = arith.subf %44, %49 : vector<2x128xf32>
    %51 = arith.mulf %50, %50 : vector<2x128xf32>
    %cst_29 = arith.constant dense<0.000000e+00> : vector<2xf32>
    %52 = vector.multi_reduction <add>, %51, %cst_29 [1] : vector<2x128xf32> to vector<2xf32>
    %53 = vector.shape_cast %52 : vector<2xf32> to vector<2x1xf32>
    %cst_30 = arith.constant 1.280000e+02 : f32
    %54 = vector.broadcast %cst_30 : f32 to vector<2x1xf32>
    %55 = arith.divf %53, %54 : vector<2x1xf32>
    %cst_31 = arith.constant 9.99999974E-6 : f32
    %56 = vector.broadcast %cst_31 : f32 to vector<2x1xf32>
    %57 = arith.addf %55, %56 : vector<2x1xf32>
    %58 = math.rsqrt %57 : vector<2x1xf32>
    %59 = vector.broadcast %58 : vector<2x1xf32> to vector<2x128xf32>
    %60 = arith.mulf %50, %59 : vector<2x128xf32>
    %61 = vector.broadcast %17 : vector<1x128xf32> to vector<2x128xf32>
    %62 = arith.mulf %60, %61 : vector<2x128xf32>
    %63 = vector.broadcast %19 : vector<1x128xf32> to vector<2x128xf32>
    %64 = arith.addf %62, %63 : vector<2x128xf32>
    %c0_32 = arith.constant 0 : index
    %c0_33 = arith.constant 0 : index
    %c128 = arith.constant 128 : index
    %65 = vector.load %arg9[%c0_32, %c0_33, %c128] : memref<1x2x512xf32, #tpu.memory_space<vmem>>, vector<1x2x128xf32>
    %66 = vector.shape_cast %65 : vector<1x2x128xf32> to vector<2x128xf32>
    %67 = vector.shape_cast %64 : vector<2x128xf32> to vector<1x2x128xf32>
    tpu.vector_store %arg9[%c0_32, %c0_33, %c128], %67 {strides = array<i32>} : memref<1x2x512xf32, #tpu.memory_space<vmem>>, vector<1x2x128xf32>,
    %68 = vector.extract_strided_slice %15 {offsets = [0, 256], sizes = [2, 128], strides = [1, 1]} : vector<2x512xf32> to vector<2x128xf32>
    %cst_34 = arith.constant dense<0.000000e+00> : vector<2xf32>
    %69 = vector.multi_reduction <add>, %68, %cst_34 [1] : vector<2x128xf32> to vector<2xf32>
    %70 = vector.shape_cast %69 : vector<2xf32> to vector<2x1xf32>
    %cst_35 = arith.constant 1.280000e+02 : f32
    %71 = vector.broadcast %cst_35 : f32 to vector<2x1xf32>
    %72 = arith.divf %70, %71 : vector<2x1xf32>
    %73 = vector.broadcast %72 : vector<2x1xf32> to vector<2x128xf32>
    %74 = arith.subf %68, %73 : vector<2x128xf32>
    %75 = arith.mulf %74, %74 : vector<2x128xf32>
    %cst_36 = arith.constant dense<0.000000e+00> : vector<2xf32>
    %76 = vector.multi_reduction <add>, %75, %cst_36 [1] : vector<2x128xf32> to vector<2xf32>
    %77 = vector.shape_cast %76 : vector<2xf32> to vector<2x1xf32>
    %cst_37 = arith.constant 1.280000e+02 : f32
    %78 = vector.broadcast %cst_37 : f32 to vector<2x1xf32>
    %79 = arith.divf %77, %78 : vector<2x1xf32>
    %cst_38 = arith.constant 9.99999974E-6 : f32
    %80 = vector.broadcast %cst_38 : f32 to vector<2x1xf32>
    %81 = arith.addf %79, %80 : vector<2x1xf32>
    %82 = math.rsqrt %81 : vector<2x1xf32>
    %83 = vector.broadcast %82 : vector<2x1xf32> to vector<2x128xf32>
    %84 = arith.mulf %74, %83 : vector<2x128xf32>
    %85 = vector.broadcast %17 : vector<1x128xf32> to vector<2x128xf32>
    %86 = arith.mulf %84, %85 : vector<2x128xf32>
    %87 = vector.broadcast %19 : vector<1x128xf32> to vector<2x128xf32>
    %88 = arith.addf %86, %87 : vector<2x128xf32>
    %c0_39 = arith.constant 0 : index
    %c0_40 = arith.constant 0 : index
    %c256 = arith.constant 256 : index
    %89 = vector.load %arg9[%c0_39, %c0_40, %c256] : memref<1x2x512xf32, #tpu.memory_space<vmem>>, vector<1x2x128xf32>
    %90 = vector.shape_cast %89 : vector<1x2x128xf32> to vector<2x128xf32>
    %91 = vector.shape_cast %88 : vector<2x128xf32> to vector<1x2x128xf32>
    tpu.vector_store %arg9[%c0_39, %c0_40, %c256], %91 {strides = array<i32>} : memref<1x2x512xf32, #tpu.memory_space<vmem>>, vector<1x2x128xf32>,
    %92 = vector.extract_strided_slice %15 {offsets = [0, 384], sizes = [2, 128], strides = [1, 1]} : vector<2x512xf32> to vector<2x128xf32>
    %cst_41 = arith.constant dense<0.000000e+00> : vector<2xf32>
    %93 = vector.multi_reduction <add>, %92, %cst_41 [1] : vector<2x128xf32> to vector<2xf32>
    %94 = vector.shape_cast %93 : vector<2xf32> to vector<2x1xf32>
    %cst_42 = arith.constant 1.280000e+02 : f32
    %95 = vector.broadcast %cst_42 : f32 to vector<2x1xf32>
    %96 = arith.divf %94, %95 : vector<2x1xf32>
    %97 = vector.broadcast %96 : vector<2x1xf32> to vector<2x128xf32>
    %98 = arith.subf %92, %97 : vector<2x128xf32>
    %99 = arith.mulf %98, %98 : vector<2x128xf32>
    %cst_43 = arith.constant dense<0.000000e+00> : vector<2xf32>
    %100 = vector.multi_reduction <add>, %99, %cst_43 [1] : vector<2x128xf32> to vector<2xf32>
    %101 = vector.shape_cast %100 : vector<2xf32> to vector<2x1xf32>
    %cst_44 = arith.constant 1.280000e+02 : f32
    %102 = vector.broadcast %cst_44 : f32 to vector<2x1xf32>
    %103 = arith.divf %101, %102 : vector<2x1xf32>
    %cst_45 = arith.constant 9.99999974E-6 : f32
    %104 = vector.broadcast %cst_45 : f32 to vector<2x1xf32>
    %105 = arith.addf %103, %104 : vector<2x1xf32>
    %106 = math.rsqrt %105 : vector<2x1xf32>
    %107 = vector.broadcast %106 : vector<2x1xf32> to vector<2x128xf32>
    %108 = arith.mulf %98, %107 : vector<2x128xf32>
    %109 = vector.broadcast %17 : vector<1x128xf32> to vector<2x128xf32>
    %110 = arith.mulf %108, %109 : vector<2x128xf32>
    %111 = vector.broadcast %19 : vector<1x128xf32> to vector<2x128xf32>
    %112 = arith.addf %110, %111 : vector<2x128xf32>
    %c0_46 = arith.constant 0 : index
    %c0_47 = arith.constant 0 : index
    %c384 = arith.constant 384 : index
    %113 = vector.load %arg9[%c0_46, %c0_47, %c384] : memref<1x2x512xf32, #tpu.memory_space<vmem>>, vector<1x2x128xf32>
    %114 = vector.shape_cast %113 : vector<1x2x128xf32> to vector<2x128xf32>
    %115 = vector.shape_cast %112 : vector<2x128xf32> to vector<1x2x128xf32>
    tpu.vector_store %arg9[%c0_46, %c0_47, %c384], %115 {strides = array<i32>} : memref<1x2x512xf32, #tpu.memory_space<vmem>>, vector<1x2x128xf32>,
    return
  }
  func.func @transform_0(%arg0: i32, %arg1: i32) -> (i32, i32, i32) {
    %c0_i32 = arith.constant 0 : i32
    %c0_i32_0 = arith.constant 0 : i32
    %c0_i32_1 = arith.constant 0 : i32
    return %arg0, %c0_i32, %c0_i32_0 : i32, i32, i32
  }
  func.func @transform_1(%arg0: i32, %arg1: i32) -> (i32, i32) {
    %c0_i32 = arith.constant 0 : i32
    %c0_i32_0 = arith.constant 0 : i32
    %c0_i32_1 = arith.constant 0 : i32
    return %c0_i32, %c0_i32_0 : i32, i32
  }
  func.func @transform_2(%arg0: i32, %arg1: i32) -> (i32, i32) {
    %c0_i32 = arith.constant 0 : i32
    %c0_i32_0 = arith.constant 0 : i32
    %c0_i32_1 = arith.constant 0 : i32
    return %c0_i32, %c0_i32_0 : i32, i32
  }
  func.func @transform_3(%arg0: i32, %arg1: i32) -> (i32, i32, i32) {
    %c0_i32 = arith.constant 0 : i32
    %c0_i32_0 = arith.constant 0 : i32
    return %arg0, %c0_i32, %arg1 : i32, i32, i32
  }
  func.func @transform_4(%arg0: i32, %arg1: i32) -> (i32, i32, i32) {
    %c0_i32 = arith.constant 0 : i32
    %c0_i32_0 = arith.constant 0 : i32
    return %arg0, %c0_i32, %arg1 : i32, i32, i32
  }
  func.func @transform_5(%arg0: i32, %arg1: i32) -> (i32, i32, i32) {
    %c0_i32 = arith.constant 0 : i32
    %c0_i32_0 = arith.constant 0 : i32
    %c0_i32_1 = arith.constant 0 : i32
    return %arg0, %c0_i32, %c0_i32_0 : i32, i32, i32
  }
  func.func @transform_6(%arg0: i32, %arg1: i32) -> (i32, i32, i32) {
    %c0_i32 = arith.constant 0 : i32
    %c0_i32_0 = arith.constant 0 : i32
    %c0_i32_1 = arith.constant 0 : i32
    return %arg0, %c0_i32, %c0_i32_0 : i32, i32, i32
  }
  func.func @transform_7(%arg0: i32, %arg1: i32) -> (i32, i32, i32) {
    %c0_i32 = arith.constant 0 : i32
    %c0_i32_0 = arith.constant 0 : i32
    return %arg0, %c0_i32, %arg1 : i32, i32, i32
  }
}

</mosaic_0001>

<llo_original>
// kernel: squeeze.2
$region0: #{squeeze.2}
  %s0 = inlined_call_operand.vmem [shape: f32[1,2,512], index: 0, kind: input, shape index: {}]
  %s1 = inlined_call_operand.hbm [shape: f32[2,4,128], index: 1, kind: output, shape index: {}]
  $region1: #{squeeze.2} parent=0
    #allocation0 [shape = 'u8[4096]{0}', space=vmem, size = 0x1000, scoped, tag = 'operand span for operand 1']
    #allocation1 [shape = 's32[1]{0}', space=sflag, size = 0x4, scoped, tag = 'scoped memory for squeeze.2']
    #allocation2 [shape = 'u8[8192]{0}', space=vmem, size = 0x2000, scoped, tag = 'scoped mem for output reshape']
    #allocation3 [shape = 'u8[16384]{0}', space=vmem, size = 0x4000, scoped, tag = 'scoped mem for input reshape']
    %2 = vsyncpa [#allocation1], 0
    %s4 = sshllo.u32 0, 2
    %s5 = smul.addr 2, 3
    %s6 = scalar_lea.vmem %s0, %s5
    %v7 = vld [vmem:[%s6] sm:%s4]
    %s8 = scalar_lea.vmem [#allocation3], 24
    %9 = vst [vmem:[%s8] sm:%s4] %v7
    %s10 = smul.addr 2, 2
    %s11 = scalar_lea.vmem %s0, %s10
    %v12 = vld [vmem:[%s11] sm:%s4]
    %s13 = scalar_lea.vmem [#allocation3], 16
    %14 = vst [vmem:[%s13] sm:%s4] %v12
    %s15 = scalar_lea.vmem %s0, 2
    %v16 = vld [vmem:[%s15] sm:%s4]
    %s17 = scalar_lea.vmem [#allocation3], 8
    %18 = vst [vmem:[%s17] sm:%s4] %v16
    %v19 = vld [vmem:[%s0] sm:%s4]
    %20 = vst [vmem:[#allocation3] sm:%s4] %v19
    %v21 = vld [vmem:[#allocation3] sm:$0x3]
    %22 = vst [vmem:[#allocation2] ss:$8 sm:$0x3] %v21
    %s23 = scalar_lea.vmem [#allocation3], 8
    %v24 = vld [vmem:[%s23] sm:$0x3]
    %s25 = scalar_lea.vmem [#allocation2], 1
    %26 = vst [vmem:[%s25] ss:$8 sm:$0x3] %v24
    %s27 = scalar_lea.vmem [#allocation3], 16
    %v28 = vld [vmem:[%s27] sm:$0x3]
    %s29 = scalar_lea.vmem [#allocation2], 2
    %30 = vst [vmem:[%s29] ss:$8 sm:$0x3] %v28
    %s31 = scalar_lea.vmem [#allocation3], 24
    %v32 = vld [vmem:[%s31] sm:$0x3]
    %s33 = scalar_lea.vmem [#allocation2], 3
    %34 = vst [vmem:[%s33] ss:$8 sm:$0x3] %v32
    %s36 = sshllo.u32 0, 4
    %v38 = vld [vmem:[#allocation2] sm:%s36]
    %s39 = sshllo.u32 0, 4
    %40 = vst [vmem:[#allocation0] sm:%s39] %v38
    %s41 = scalar_lea.vmem [#allocation2], 8
    %v42 = vld [vmem:[%s41] sm:%s36]
    %s43 = sshllo.u32 0, 4
    %s44 = scalar_lea.vmem [#allocation0], 4
    %45 = vst [vmem:[%s44] sm:%s43] %v42
    %s47 = ssub.s32 128, 128
    %48 = vsyncadd [#allocation1], %s47
    %s50 = sshll.u32 [#allocation0], 4
    %s51 = int_to_ptr.vmem [resolvable:$true] %s50
    %53 = dma.vmem_to_hbm [thread:$0]  %s51, 128, %s1, [#allocation1]
    %54 = dma.done [#allocation1], 128
    %55 = vsyncpa [#allocation1], 1

// kernel: projector_forward.1
$region0: #{projector_forward.1}
  #allocation0 [shape = 'u32[]', space=smem, size = 0x4, offset = 0x4, fixed_abs, tag = 'smem constant byte address 0x4 - core index']
  #allocation1 [shape = 'u32[144,128]{1,0:T(1,128)}', space=vmem, size = 0x12000, scoped, tag = 'internal scratch']
  %s0 = inlined_call_operand.vmem [shape: f32[2,2,128], index: 0, kind: input, shape index: {}]
  %s1 = inlined_call_operand.vmem [shape: bf16[128,256], index: 1, kind: input, shape index: {}]
  %s2 = inlined_call_operand.vmem [shape: f32[1,256], index: 2, kind: input, shape index: {}]
  %s3 = inlined_call_operand.vmem [shape: bf16[2,256,512], index: 3, kind: input, shape index: {}]
  %s4 = inlined_call_operand.vmem [shape: f32[2,1,512], index: 4, kind: input, shape index: {}]
  %s5 = inlined_call_operand.vmem [shape: f32[2,1,128], index: 5, kind: input, shape index: {}]
  %s6 = inlined_call_operand.vmem [shape: f32[2,1,128], index: 6, kind: input, shape index: {}]
  %s7 = inlined_call_operand.vmem [shape: f32[2,2,512], index: 7, kind: output, shape index: {}]
  %s8 = sld [smem:[#allocation0]]
  $region61: #{projector_forward.1} parent=0
    _
  %s10 = ssub.s32 1, %s8
  %s11 = scalar_select 0, %s10, %s8
  loop: start=0, step=1, limit=4
  $region2: #{projector_forward.1} parent=0 // loop_pre_header
    _
  $region3: #{projector_forward.1} parent=0 // loop_header
    %s13 = sphi 0, %s17
    %p14 = scmp.ge.s32.totalorder %s13, 4
    %s20 = sphi 0, %s32
    %s21 = sphi 0, %s28
    %s22 = sphi 0, %s20
    %s23 = sphi 0, %s21
    %s24 = sphi 0, %s22
    %s25 = sphi 0, %s23
    %s35 = sphi 0, %s37
    %s38 = sphi 0, %s35
    %s39 = sphi 0, %s38
    %s55 = sphi 0, %s39
    %s59 = sphi 0, %s59
    %s61 = sphi 0, %s59
    %s62 = sphi 0, %s61
    %s76 = sphi 0, %s62
    %s80 = sphi 0, %s80
    %s82 = sphi 0, %s80
    %s83 = sphi 0, %s82
    %s97 = sphi 0, %s83
    %s105 = sphi 0, %s107
    %s108 = sphi 0, %s105
    %s109 = sphi 0, %s108
    %s125 = sphi 0, %s109
    %s133 = sphi 0, %s135
    %s136 = sphi 0, %s133
    %s137 = sphi 0, %s136
    %s153 = sphi 0, %s137
    %s159 = sphi 0, %s161
    %s162 = sphi 0, %s159
    %s163 = sphi 0, %s162
    %s179 = sphi 0, %s163
    %s185 = sphi 0, %s187
    %s188 = sphi 0, %s185
    %s189 = sphi 0, %s188
    %s205 = sphi 0, %s189
    %s213 = sphi 0, %s215
    %s216 = sphi 0, %s213
    %s217 = sphi 0, %s216
    %s233 = sphi 0, %s217
  $region4: #{projector_forward.1} parent=0 // loop_header_branch
    %16 = sbr.rel (%p14) target = $region8
  $region5: #{projector_forward.1} parent=0 // loop_body
    %s18 = ssub.s32 %s13, 1
    %s19 = ssub.s32 %s13, 2
    %s26 = sadd.s32 1, %s21
    %p27 = scmp.ge.s32.totalorder %s26, 1
    %s28 = scalar_select %p27, 0, %s26
    %s29 = sadd.s32 1, %s20
    %s30 = scalar_select %p27, %s29, %s20
    %p31 = scmp.ge.s32.totalorder %s30, 2
    %s32 = scalar_select %p31, 0, %s30
    %s33 = ssub.s32 %s20, %s32
    %p34 = scmp.eq.s32.totalorder %s33, 0
    %s36 = sadd.s32 %s35, 1
    %s37 = scalar_select %p34, %s35, %s36
    %p40 = pneg %p34
    %p41 = scmp.eq.s32.totalorder %s13, 1
    %p42 = por %p40, %p41
    %p43 = scmp.ne.s32.totalorder %s35, %s38
    %p44 = scmp.eq.s32.totalorder %s13, 0
    %p45 = por %p43, %p44
    %p46 = scmp.ne.s32.totalorder %s35, %s38
    %p47 = scmp.eq.s32.totalorder %s18, 1
    %p48 = por %p46, %p47
    %p49 = scmp.ne.s32.totalorder %s38, %s39
    %p50 = scmp.eq.s32.totalorder %s18, 0
    %p51 = por %p49, %p50
    %p52 = scmp.ne.s32.totalorder %s38, %s39
    %p53 = scmp.eq.s32.totalorder %s19, 1
    %p54 = por %p52, %p53
    %p56 = scmp.ne.s32.totalorder %s39, %s55
    %p57 = scmp.eq.s32.totalorder %s19, 0
    %p58 = por %p56, %p57
    %s60 = sadd.s32 %s59, 1
    %p63 = scmp.eq.s32.totalorder %s13, 1
    %p64 = scmp.ne.s32.totalorder %s59, %s61
    %p65 = scmp.eq.s32.totalorder %s13, 0
    %p66 = por %p64, %p65
    %p67 = scmp.ne.s32.totalorder %s59, %s61
    %p68 = scmp.eq.s32.totalorder %s18, 1
    %p69 = por %p67, %p68
    %p70 = scmp.ne.s32.totalorder %s61, %s62
    %p71 = scmp.eq.s32.totalorder %s18, 0
    %p72 = por %p70, %p71
    %p73 = scmp.ne.s32.totalorder %s61, %s62
    %p74 = scmp.eq.s32.totalorder %s19, 1
    %p75 = por %p73, %p74
    %p77 = scmp.ne.s32.totalorder %s62, %s76
    %p78 = scmp.eq.s32.totalorder %s19, 0
    %p79 = por %p77, %p78
    %s81 = sadd.s32 %s80, 1
    %p84 = scmp.eq.s32.totalorder %s13, 1
    %p85 = scmp.ne.s32.totalorder %s80, %s82
    %p86 = scmp.eq.s32.totalorder %s13, 0
    %p87 = por %p85, %p86
    %p88 = scmp.ne.s32.totalorder %s80, %s82
    %p89 = scmp.eq.s32.totalorder %s18, 1
    %p90 = por %p88, %p89
    %p91 = scmp.ne.s32.totalorder %s82, %s83
    %p92 = scmp.eq.s32.totalorder %s18, 0
    %p93 = por %p91, %p92
    %p94 = scmp.ne.s32.totalorder %s82, %s83
    %p95 = scmp.eq.s32.totalorder %s19, 1
    %p96 = por %p94, %p95
    %p98 = scmp.ne.s32.totalorder %s83, %s97
    %p99 = scmp.eq.s32.totalorder %s19, 0
    %p100 = por %p98, %p99
    %s101 = ssub.s32 %s20, %s32
    %s102 = ssub.s32 %s21, %s28
    %s103 = sor.u32 %s101, %s102
    %p104 = scmp.eq.s32.totalorder %s103, 0
    %s106 = sadd.s32 %s105, 1
    %s107 = scalar_select %p104, %s105, %s106
    %p110 = pneg %p104
    %p111 = scmp.eq.s32.totalorder %s13, 1
    %p112 = por %p110, %p111
    %p113 = scmp.ne.s32.totalorder %s105, %s108
    %p114 = scmp.eq.s32.totalorder %s13, 0
    %p115 = por %p113, %p114
    %p116 = scmp.ne.s32.totalorder %s105, %s108
    %p117 = scmp.eq.s32.totalorder %s18, 1
    %p118 = por %p116, %p117
    %p119 = scmp.ne.s32.totalorder %s108, %s109
    %p120 = scmp.eq.s32.totalorder %s18, 0
    %p121 = por %p119, %p120
    %p122 = scmp.ne.s32.totalorder %s108, %s109
    %p123 = scmp.eq.s32.totalorder %s19, 1
    %p124 = por %p122, %p123
    %p126 = scmp.ne.s32.totalorder %s109, %s125
    %p127 = scmp.eq.s32.totalorder %s19, 0
    %p128 = por %p126, %p127
    %s129 = ssub.s32 %s20, %s32
    %s130 = ssub.s32 %s21, %s28
    %s131 = sor.u32 %s129, %s130
    %p132 = scmp.eq.s32.totalorder %s131, 0
    %s134 = sadd.s32 %s133, 1
    %s135 = scalar_select %p132, %s133, %s134
    %p138 = pneg %p132
    %p139 = scmp.eq.s32.totalorder %s13, 1
    %p140 = por %p138, %p139
    %p141 = scmp.ne.s32.totalorder %s133, %s136
    %p142 = scmp.eq.s32.totalorder %s13, 0
    %p143 = por %p141, %p142
    %p144 = scmp.ne.s32.totalorder %s133, %s136
    %p145 = scmp.eq.s32.totalorder %s18, 1
    %p146 = por %p144, %p145
    %p147 = scmp.ne.s32.totalorder %s136, %s137
    %p148 = scmp.eq.s32.totalorder %s18, 0
    %p149 = por %p147, %p148
    %p150 = scmp.ne.s32.totalorder %s136, %s137
    %p151 = scmp.eq.s32.totalorder %s19, 1
    %p152 = por %p150, %p151
    %p154 = scmp.ne.s32.totalorder %s137, %s153
    %p155 = scmp.eq.s32.totalorder %s19, 0
    %p156 = por %p154, %p155
    %s157 = ssub.s32 %s20, %s32
    %p158 = scmp.eq.s32.totalorder %s157, 0
    %s160 = sadd.s32 %s159, 1
    %s161 = scalar_select %p158, %s159, %s160
    %p164 = pneg %p158
    %p165 = scmp.eq.s32.totalorder %s13, 1
    %p166 = por %p164, %p165
    %p167 = scmp.ne.s32.totalorder %s159, %s162
    %p168 = scmp.eq.s32.totalorder %s13, 0
    %p169 = por %p167, %p168
    %p170 = scmp.ne.s32.totalorder %s159, %s162
    %p171 = scmp.eq.s32.totalorder %s18, 1
    %p172 = por %p170, %p171
    %p173 = scmp.ne.s32.totalorder %s162, %s163
    %p174 = scmp.eq.s32.totalorder %s18, 0
    %p175 = por %p173, %p174
    %p176 = scmp.ne.s32.totalorder %s162, %s163
    %p177 = scmp.eq.s32.totalorder %s19, 1
    %p178 = por %p176, %p177
    %p180 = scmp.ne.s32.totalorder %s163, %s179
    %p181 = scmp.eq.s32.totalorder %s19, 0
    %p182 = por %p180, %p181
    %s183 = ssub.s32 %s20, %s32
    %p184 = scmp.eq.s32.totalorder %s183, 0
    %s186 = sadd.s32 %s185, 1
    %s187 = scalar_select %p184, %s185, %s186
    %p190 = pneg %p184
    %p191 = scmp.eq.s32.totalorder %s13, 1
    %p192 = por %p190, %p191
    %p193 = scmp.ne.s32.totalorder %s185, %s188
    %p194 = scmp.eq.s32.totalorder %s13, 0
    %p195 = por %p193, %p194
    %p196 = scmp.ne.s32.totalorder %s185, %s188
    %p197 = scmp.eq.s32.totalorder %s18, 1
    %p198 = por %p196, %p197
    %p199 = scmp.ne.s32.totalorder %s188, %s189
    %p200 = scmp.eq.s32.totalorder %s18, 0
    %p201 = por %p199, %p200
    %p202 = scmp.ne.s32.totalorder %s188, %s189
    %p203 = scmp.eq.s32.totalorder %s19, 1
    %p204 = por %p202, %p203
    %p206 = scmp.ne.s32.totalorder %s189, %s205
    %p207 = scmp.eq.s32.totalorder %s19, 0
    %p208 = por %p206, %p207
    %s209 = ssub.s32 %s20, %s32
    %s210 = ssub.s32 %s21, %s28
    %s211 = sor.u32 %s209, %s210
    %p212 = scmp.eq.s32.totalorder %s211, 0
    %s214 = sadd.s32 %s213, 1
    %s215 = scalar_select %p212, %s213, %s214
    %p218 = pneg %p212
    %p219 = scmp.eq.s32.totalorder %s13, 1
    %p220 = por %p218, %p219
    %p221 = scmp.ne.s32.totalorder %s213, %s216
    %p222 = scmp.eq.s32.totalorder %s13, 0
    %p223 = por %p221, %p222
    %p224 = scmp.ne.s32.totalorder %s213, %s216
    %p225 = scmp.eq.s32.totalorder %s18, 1
    %p226 = por %p224, %p225
    %p227 = scmp.ne.s32.totalorder %s216, %s217
    %p228 = scmp.eq.s32.totalorder %s18, 0
    %p229 = por %p227, %p228
    %p230 = scmp.ne.s32.totalorder %s216, %s217
    %p231 = scmp.eq.s32.totalorder %s19, 1
    %p232 = por %p230, %p231
    %p234 = scmp.ne.s32.totalorder %s217, %s233
    %p235 = scmp.eq.s32.totalorder %s19, 0
    %p236 = por %p234, %p235
    %p237 = scmp.le.s32.totalorder 1, %s13
    %p238 = scmp.lt.s32.totalorder %s13, 3
    %p239 = pnand %p237, %p238
    %p240 = pneg %p239
    // Predicated region
    $region9: #{projector_forward.1} parent=5 // pred_check
      _
    $region10: #{projector_forward.1} parent=5 // pred_check_branch
      %242 = sbr.rel (%p239) target = $region12
    $region11: #{projector_forward.1} parent=5 // pred_region
      %s243 = ssub.s32 %s13, 1
      // Predicated region
      $region13: #{projector_forward.1} parent=11 // pred_check
        %p244 = pneg %p72
      $region14: #{projector_forward.1} parent=11 // pred_check_branch
        %246 = sbr.rel (%p244) target = $region16
      $region15: #{projector_forward.1} parent=11 // pred_region
        _
      $region16: #{projector_forward.1} parent=11 // pred_fallthru
        _
      // Predicated region
      $region17: #{projector_forward.1} parent=11 // pred_check
        %p247 = pneg %p93
      $region18: #{projector_forward.1} parent=11 // pred_check_branch
        %249 = sbr.rel (%p247) target = $region20
      $region19: #{projector_forward.1} parent=11 // pred_region
        _
      $region20: #{projector_forward.1} parent=11 // pred_fallthru
        _
    $region12: #{projector_forward.1} parent=5 // pred_fallthru
      _
    %p250 = scmp.lt.s32.totalorder %s13, 2
    // Predicated region
    $region21: #{projector_forward.1} parent=5 // pred_check
      %p251 = pneg %p250
    $region22: #{projector_forward.1} parent=5 // pred_check_branch
      %253 = sbr.rel (%p251) target = $region24
    $region23: #{projector_forward.1} parent=5 // pred_region
      // Predicated region
      $region25: #{projector_forward.1} parent=23 // pred_check
        %p254 = pneg %p45
      $region26: #{projector_forward.1} parent=23 // pred_check_branch
        %256 = sbr.rel (%p254) target = $region28
      $region27: #{projector_forward.1} parent=23 // pred_region
        %p257 = scmp.lt.s32.totalorder %s20, 1
        %s258 = scalar_select %p257, %s20, 1
        %s259 = smul.addr %s258, 2
        %s260 = scalar_lea.vmem %s0, %s259
      $region28: #{projector_forward.1} parent=23 // pred_fallthru
        _
      // Predicated region
      $region29: #{projector_forward.1} parent=23 // pred_check
        %p261 = pneg %p115
      $region30: #{projector_forward.1} parent=23 // pred_check_branch
        %263 = sbr.rel (%p261) target = $region32
      $region31: #{projector_forward.1} parent=23 // pred_region
        %s264 = smul.u32 4, %s21
        %p265 = scmp.lt.s32.totalorder %s20, 1
        %s266 = scalar_select %p265, %s20, 1
        %p267 = scmp.lt.s32.totalorder %s264, 3
        %s268 = scalar_select %p267, %s264, 3
        %s269 = smul.addr %s266, 128
        %s270 = sadd.s32 %s268, %s269
        %s271 = smul.addr %s270, 4
        %s272 = scalar_lea.vmem %s3, %s271
        %s273 = smul.u32 4, %s21
      $region32: #{projector_forward.1} parent=23 // pred_fallthru
        _
      // Predicated region
      $region33: #{projector_forward.1} parent=23 // pred_check
        %p274 = pneg %p143
      $region34: #{projector_forward.1} parent=23 // pred_check_branch
        %276 = sbr.rel (%p274) target = $region36
      $region35: #{projector_forward.1} parent=23 // pred_region
        %s277 = smul.u32 4, %s21
        %p278 = scmp.lt.s32.totalorder %s20, 1
        %s279 = scalar_select %p278, %s20, 1
        %p280 = scmp.lt.s32.totalorder %s277, 3
        %s281 = scalar_select %p280, %s277, 3
        %s282 = smul.addr %s279, 4
        %s283 = sadd.s32 %s281, %s282
        %s284 = scalar_lea.vmem %s4, %s283
        %s285 = smul.u32 4, %s21
      $region36: #{projector_forward.1} parent=23 // pred_fallthru
        _
      // Predicated region
      $region37: #{projector_forward.1} parent=23 // pred_check
        %p286 = pneg %p169
      $region38: #{projector_forward.1} parent=23 // pred_check_branch
        %288 = sbr.rel (%p286) target = $region40
      $region39: #{projector_forward.1} parent=23 // pred_region
        %p289 = scmp.lt.s32.totalorder %s20, 1
        %s290 = scalar_select %p289, %s20, 1
        %s291 = scalar_lea.vmem %s5, %s290
      $region40: #{projector_forward.1} parent=23 // pred_fallthru
        _
      // Predicated region
      $region41: #{projector_forward.1} parent=23 // pred_check
        %p292 = pneg %p195
      $region42: #{projector_forward.1} parent=23 // pred_check_branch
        %294 = sbr.rel (%p292) target = $region44
      $region43: #{projector_forward.1} parent=23 // pred_region
        %p295 = scmp.lt.s32.totalorder %s20, 1
        %s296 = scalar_select %p295, %s20, 1
        %s297 = scalar_lea.vmem %s6, %s296
      $region44: #{projector_forward.1} parent=23 // pred_fallthru
        _
    $region24: #{projector_forward.1} parent=5 // pred_fallthru
      _
    %p298 = scmp.le.s32.totalorder 1, %s13
    %p299 = scmp.lt.s32.totalorder %s13, 3
    %p300 = pnand %p298, %p299
    %p301 = pneg %p300
    // Predicated region
    $region45: #{projector_forward.1} parent=5 // pred_check
      _
    $region46: #{projector_forward.1} parent=5 // pred_check_branch
      %303 = sbr.rel (%p300) target = $region48
    $region47: #{projector_forward.1} parent=5 // pred_region
      %s304 = ssub.s32 %s13, 1
      %p305 = scmp.lt.s32.totalorder %s22, 1
      %s306 = scalar_select %p305, %s22, 1
      %s307 = smul.addr %s306, 2
      %s308 = scalar_lea.vmem %s0, %s307
      %p309 = pneg %p51
      %p310 = pneg %p48
      %p311 = pneg %p72
      %p312 = pneg %p69
      %p313 = pneg %p93
      %p314 = pneg %p90
      %s315 = smul.u32 4, %s23
      %p316 = scmp.lt.s32.totalorder %s22, 1
      %s317 = scalar_select %p316, %s22, 1
      %p318 = scmp.lt.s32.totalorder %s315, 3
      %s319 = scalar_select %p318, %s315, 3
      %s320 = smul.addr %s317, 128
      %s321 = sadd.s32 %s319, %s320
      %s322 = smul.addr %s321, 4
      %s323 = scalar_lea.vmem %s3, %s322
      %p324 = pneg %p121
      %p325 = pneg %p118
      %s326 = smul.u32 4, %s23
      %p327 = scmp.lt.s32.totalorder %s22, 1
      %s328 = scalar_select %p327, %s22, 1
      %p329 = scmp.lt.s32.totalorder %s326, 3
      %s330 = scalar_select %p329, %s326, 3
      %s331 = smul.addr %s328, 4
      %s332 = sadd.s32 %s330, %s331
      %s333 = scalar_lea.vmem %s4, %s332
      %p334 = pneg %p149
      %p335 = pneg %p146
      %p336 = scmp.lt.s32.totalorder %s22, 1
      %s337 = scalar_select %p336, %s22, 1
      %s338 = scalar_lea.vmem %s5, %s337
      %p339 = pneg %p175
      %p340 = pneg %p172
      %p341 = scmp.lt.s32.totalorder %s22, 1
      %s342 = scalar_select %p341, %s22, 1
      %s343 = scalar_lea.vmem %s6, %s342
      %p344 = pneg %p201
      %p345 = pneg %p198
      %p346 = pneg %p229
      %p347 = pneg %p226
      %s348 = smul.u32 4, %s23
      %p349 = scmp.lt.s32.totalorder %s22, 1
      %s350 = scalar_select %p349, %s22, 1
      %p351 = scmp.lt.s32.totalorder %s348, 3
      %s352 = scalar_select %p351, %s348, 3
      %s353 = smul.addr %s350, 4
      %s354 = sadd.s32 %s352, %s353
      %s355 = smul.addr %s354, 2
      %s356 = scalar_lea.vmem %s7, %s355
      %p357 = scmp.lt.s32.totalorder %s22, 1
      %s358 = scalar_select %p357, %s22, 1
      %s359 = smul.addr %s358, 2
      %s360 = scalar_lea.vmem %s0, %s359
      %s361 = smul.u32 4, %s23
      %p362 = scmp.lt.s32.totalorder %s22, 1
      %s363 = scalar_select %p362, %s22, 1
      %p364 = scmp.lt.s32.totalorder %s361, 3
      %s365 = scalar_select %p364, %s361, 3
      %s366 = smul.addr %s363, 128
      %s367 = sadd.s32 %s365, %s366
      %s368 = smul.addr %s367, 4
      %s369 = scalar_lea.vmem %s3, %s368
      %s370 = smul.u32 4, %s23
      %s371 = smul.u32 4, %s23
      %p372 = scmp.lt.s32.totalorder %s22, 1
      %s373 = scalar_select %p372, %s22, 1
      %p374 = scmp.lt.s32.totalorder %s371, 3
      %s375 = scalar_select %p374, %s371, 3
      %s376 = smul.addr %s373, 4
      %s377 = sadd.s32 %s375, %s376
      %s378 = scalar_lea.vmem %s4, %s377
      %s379 = smul.u32 4, %s23
      %p380 = scmp.lt.s32.totalorder %s22, 1
      %s381 = scalar_select %p380, %s22, 1
      %s382 = scalar_lea.vmem %s5, %s381
      %p383 = scmp.lt.s32.totalorder %s22, 1
      %s384 = scalar_select %p383, %s22, 1
      %s385 = scalar_lea.vmem %s6, %s384
      %s386 = smul.u32 4, %s23
      %p387 = scmp.lt.s32.totalorder %s22, 1
      %s388 = scalar_select %p387, %s22, 1
      %p389 = scmp.lt.s32.totalorder %s386, 3
      %s390 = scalar_select %p389, %s386, 3
      %s391 = smul.addr %s388, 4
      %s392 = sadd.s32 %s390, %s391
      %s393 = smul.addr %s392, 2
      %s394 = scalar_lea.vmem %s7, %s393
      %s395 = smul.u32 4, %s23
      %v397 = vld [vmem:[%s360] sm:$0x3]
      %v398 = vpack.c.bf16 %v397, %v397
      %v399 = vld [vmem:[%s1] sm:$0xff]
      %v400 = vld [vmem:[%s1 + $0x8] sm:$0xff]
      %v401 = vld [vmem:[%s1 + $0x10] sm:$0xff]
      %v402 = vld [vmem:[%s1 + $0x18] sm:$0xff]
      %v403 = vld [vmem:[%s1 + $0x20] sm:$0xff]
      %v404 = vld [vmem:[%s1 + $0x28] sm:$0xff]
      %v405 = vld [vmem:[%s1 + $0x30] sm:$0xff]
      %v406 = vld [vmem:[%s1 + $0x38] sm:$0xff]
      %v407 = vld [vmem:[%s1 + $0x40] sm:$0xff]
      %v408 = vld [vmem:[%s1 + $0x48] sm:$0xff]
      %v409 = vld [vmem:[%s1 + $0x50] sm:$0xff]
      %v410 = vld [vmem:[%s1 + $0x58] sm:$0xff]
      %v411 = vld [vmem:[%s1 + $0x60] sm:$0xff]
      %v412 = vld [vmem:[%s1 + $0x68] sm:$0xff]
      %v413 = vld [vmem:[%s1 + $0x70] sm:$0xff]
      %v414 = vld [vmem:[%s1 + $0x78] sm:$0xff]
      %v415 = vld [vmem:[%s2] sm:$0x3]
      %v417 = vlaneseq
      %v418 = vshrl.u32 %v417, 7
      %v419 = vsub.s32 0, %v418
      %v420 = vrot.slane %v415, %v419
      %v421 = vlaneseq
      %v422 = vshrl.u32 %v421, 7
      %v423 = vsub.s32 1, %v422
      %v424 = vrot.slane %v415, %v423
      %v443 = vunpack.c.l.b16 %v399
      %v444 = vunpack.c.h.b16 %v399
      %v445 = vunpack.c.l.b16 %v400
      %v446 = vunpack.c.h.b16 %v400
      %v447 = vunpack.c.l.b16 %v401
      %v448 = vunpack.c.h.b16 %v401
      %v449 = vunpack.c.l.b16 %v402
      %v450 = vunpack.c.h.b16 %v402
      %v451 = vunpack.c.l.b16 %v403
      %v452 = vunpack.c.h.b16 %v403
      %v453 = vunpack.c.l.b16 %v404
      %v454 = vunpack.c.h.b16 %v404
      %v455 = vunpack.c.l.b16 %v405
      %v456 = vunpack.c.h.b16 %v405
      %v457 = vunpack.c.l.b16 %v406
      %v458 = vunpack.c.h.b16 %v406
      %v459 = vunpack.c.l.b16 %v407
      %v460 = vunpack.c.h.b16 %v407
      %v461 = vunpack.c.l.b16 %v408
      %v462 = vunpack.c.h.b16 %v408
      %v463 = vunpack.c.l.b16 %v409
      %v464 = vunpack.c.h.b16 %v409
      %v465 = vunpack.c.l.b16 %v410
      %v466 = vunpack.c.h.b16 %v410
      %v467 = vunpack.c.l.b16 %v411
      %v468 = vunpack.c.h.b16 %v411
      %v469 = vunpack.c.l.b16 %v412
      %v470 = vunpack.c.h.b16 %v412
      %v471 = vunpack.c.l.b16 %v413
      %v472 = vunpack.c.h.b16 %v413
      %v473 = vunpack.c.l.b16 %v414
      %v474 = vunpack.c.h.b16 %v414
      %v475 = vpack.c.b16 %v445, %v443
      %v476 = vpack.c.b16 %v446, %v444
      %v477 = vpack.c.b16 %v449, %v447
      %v478 = vpack.c.b16 %v450, %v448
      %v479 = vpack.c.b16 %v453, %v451
      %v480 = vpack.c.b16 %v454, %v452
      %v481 = vpack.c.b16 %v457, %v455
      %v482 = vpack.c.b16 %v458, %v456
      %v483 = vpack.c.b16 %v461, %v459
      %v484 = vpack.c.b16 %v462, %v460
      %v485 = vpack.c.b16 %v465, %v463
      %v486 = vpack.c.b16 %v466, %v464
      %v487 = vpack.c.b16 %v469, %v467
      %v488 = vpack.c.b16 %v470, %v468
      %v489 = vpack.c.b16 %v473, %v471
      %v490 = vpack.c.b16 %v474, %v472
      %507 = vmatprep.subr.bf16.mxu0 %v476
      %508 = vmatpush1.bf16.msra.mxu0 %v475
      %509 = vmatprep.subr.bf16.mxu0 %v478
      %510 = vmatpush1.bf16.msra.mxu0 %v477
      %511 = vmatprep.subr.bf16.mxu0 %v480
      %512 = vmatpush1.bf16.msra.mxu0 %v479
      %513 = vmatprep.subr.bf16.mxu0 %v482
      %514 = vmatpush1.bf16.msra.mxu0 %v481
      %515 = vmatprep.subr.bf16.mxu0 %v484
      %516 = vmatpush1.bf16.msra.mxu0 %v483
      %517 = vmatprep.subr.bf16.mxu0 %v486
      %518 = vmatpush1.bf16.msra.mxu0 %v485
      %519 = vmatprep.subr.bf16.mxu0 %v488
      %520 = vmatpush1.bf16.msra.mxu0 %v487
      %521 = vmatprep.subr.bf16.mxu0 %v490
      %522 = vmatpush1.bf16.msra.mxu0 %v489
      %523 = vmatprep.subr.bf16.mxu0 0
      %524 = vmatpush1.bf16.msra.mxu0 0
      %525 = vmatprep.subr.bf16.mxu0 0
      %526 = vmatpush1.bf16.msra.mxu0 0
      %527 = vmatprep.subr.bf16.mxu0 0
      %528 = vmatpush1.bf16.msra.mxu0 0
      %529 = vmatprep.subr.bf16.mxu0 0
      %530 = vmatpush1.bf16.msra.mxu0 0
      %531 = vmatprep.subr.bf16.mxu0 0
      %532 = vmatpush1.bf16.msra.mxu0 0
      %533 = vmatprep.subr.bf16.mxu0 0
      %534 = vmatpush1.bf16.msra.mxu0 0
      %535 = vmatprep.subr.bf16.mxu0 0
      %536 = vmatpush1.bf16.msra.mxu0 0
      %537 = vmatprep.subr.bf16.mxu0 0
      %538 = vmatpush1.bf16.msra.mxu0 0
      %539 = vmatprep.mubr.bf16.mxu0 0
      %540 = vmatmul.mubr.bf16.gmra.mrb[0].mxu0 %v398
      %v541 = vpop.f32.mrb[0].mxu0
      %v542 = vadd.f32 %v420, %v541
      %v543 = vpop.f32.mrb[0].mxu0
      %v544 = vadd.f32 %v424, %v543
      %v545 = vpop.f32.mrb[0].mxu0
      %v546 = vpop.f32.mrb[0].mxu0
      %547 = vdwg.mxu0
      %v548 = vpack.c.bf16 %v542, %v542
      %v549 = vpack.c.bf16 %v544, %v544
      %v550 = vld [vmem:[%s369] sm:$0xff]
      %v551 = vld [vmem:[%s369 + $0x8] sm:$0xff]
      %v552 = vld [vmem:[%s369 + $0x10] sm:$0xff]
      %v553 = vld [vmem:[%s369 + $0x18] sm:$0xff]
      %v554 = vld [vmem:[%s369 + $0x20] sm:$0xff]
      %v555 = vld [vmem:[%s369 + $0x28] sm:$0xff]
      %v556 = vld [vmem:[%s369 + $0x30] sm:$0xff]
      %v557 = vld [vmem:[%s369 + $0x38] sm:$0xff]
      %v558 = vld [vmem:[%s369 + $0x40] sm:$0xff]
      %v559 = vld [vmem:[%s369 + $0x48] sm:$0xff]
      %v560 = vld [vmem:[%s369 + $0x50] sm:$0xff]
      %v561 = vld [vmem:[%s369 + $0x58] sm:$0xff]
      %v562 = vld [vmem:[%s369 + $0x60] sm:$0xff]
      %v563 = vld [vmem:[%s369 + $0x68] sm:$0xff]
      %v564 = vld [vmem:[%s369 + $0x70] sm:$0xff]
      %v565 = vld [vmem:[%s369 + $0x78] sm:$0xff]
      %v566 = vld [vmem:[%s369 + $0x80] sm:$0xff]
      %v567 = vld [vmem:[%s369 + $0x88] sm:$0xff]
      %v568 = vld [vmem:[%s369 + $0x90] sm:$0xff]
      %v569 = vld [vmem:[%s369 + $0x98] sm:$0xff]
      %v570 = vld [vmem:[%s369 + $0xa0] sm:$0xff]
      %v571 = vld [vmem:[%s369 + $0xa8] sm:$0xff]
      %v572 = vld [vmem:[%s369 + $0xb0] sm:$0xff]
      %v573 = vld [vmem:[%s369 + $0xb8] sm:$0xff]
      %v574 = vld [vmem:[%s369 + $0xc0] sm:$0xff]
      %v575 = vld [vmem:[%s369 + $0xc8] sm:$0xff]
      %v576 = vld [vmem:[%s369 + $0xd0] sm:$0xff]
      %v577 = vld [vmem:[%s369 + $0xd8] sm:$0xff]
      %v578 = vld [vmem:[%s369 + $0xe0] sm:$0xff]
      %v579 = vld [vmem:[%s369 + $0xe8] sm:$0xff]
      %v580 = vld [vmem:[%s369 + $0xf0] sm:$0xff]
      %v581 = vld [vmem:[%s369 + $0xf8] sm:$0xff]
      %v582 = vld [vmem:[%s369 + $0x100] sm:$0xff]
      %v583 = vld [vmem:[%s369 + $0x108] sm:$0xff]
      %v584 = vld [vmem:[%s369 + $0x110] sm:$0xff]
      %v585 = vld [vmem:[%s369 + $0x118] sm:$0xff]
      %v586 = vld [vmem:[%s369 + $0x120] sm:$0xff]
      %v587 = vld [vmem:[%s369 + $0x128] sm:$0xff]
      %v588 = vld [vmem:[%s369 + $0x130] sm:$0xff]
      %v589 = vld [vmem:[%s369 + $0x138] sm:$0xff]
      %v590 = vld [vmem:[%s369 + $0x140] sm:$0xff]
      %v591 = vld [vmem:[%s369 + $0x148] sm:$0xff]
      %v592 = vld [vmem:[%s369 + $0x150] sm:$0xff]
      %v593 = vld [vmem:[%s369 + $0x158] sm:$0xff]
      %v594 = vld [vmem:[%s369 + $0x160] sm:$0xff]
      %v595 = vld [vmem:[%s369 + $0x168] sm:$0xff]
      %v596 = vld [vmem:[%s369 + $0x170] sm:$0xff]
      %v597 = vld [vmem:[%s369 + $0x178] sm:$0xff]
      %v598 = vld [vmem:[%s369 + $0x180] sm:$0xff]
      %v599 = vld [vmem:[%s369 + $0x188] sm:$0xff]
      %v600 = vld [vmem:[%s369 + $0x190] sm:$0xff]
      %v601 = vld [vmem:[%s369 + $0x198] sm:$0xff]
      %v602 = vld [vmem:[%s369 + $0x1a0] sm:$0xff]
      %v603 = vld [vmem:[%s369 + $0x1a8] sm:$0xff]
      %v604 = vld [vmem:[%s369 + $0x1b0] sm:$0xff]
      %v605 = vld [vmem:[%s369 + $0x1b8] sm:$0xff]
      %v606 = vld [vmem:[%s369 + $0x1c0] sm:$0xff]
      %v607 = vld [vmem:[%s369 + $0x1c8] sm:$0xff]
      %v608 = vld [vmem:[%s369 + $0x1d0] sm:$0xff]
      %v609 = vld [vmem:[%s369 + $0x1d8] sm:$0xff]
      %v610 = vld [vmem:[%s369 + $0x1e0] sm:$0xff]
      %v611 = vld [vmem:[%s369 + $0x1e8] sm:$0xff]
      %v612 = vld [vmem:[%s369 + $0x1f0] sm:$0xff]
      %v613 = vld [vmem:[%s369 + $0x1f8] sm:$0xff]
      %v614 = vld [vmem:[%s378] sm:$0xf]
      %v616 = vlaneseq
      %v617 = vshrl.u32 %v616, 7
      %v618 = vsub.s32 0, %v617
      %v619 = vrot.slane %v614, %v618
      %v620 = vlaneseq
      %v621 = vshrl.u32 %v620, 7
      %v622 = vsub.s32 1, %v621
      %v623 = vrot.slane %v614, %v622
      %v624 = vlaneseq
      %v625 = vshrl.u32 %v624, 7
      %v626 = vsub.s32 2, %v625
      %v627 = vrot.slane %v614, %v626
      %v628 = vlaneseq
      %v629 = vshrl.u32 %v628, 7
      %v630 = vsub.s32 3, %v629
      %v631 = vrot.slane %v614, %v630
      %v700 = vunpack.c.l.b16 %v550
      %v701 = vunpack.c.h.b16 %v550
      %v702 = vunpack.c.l.b16 %v551
      %v703 = vunpack.c.h.b16 %v551
      %v704 = vunpack.c.l.b16 %v552
      %v705 = vunpack.c.h.b16 %v552
      %v706 = vunpack.c.l.b16 %v553
      %v707 = vunpack.c.h.b16 %v553
      %v708 = vunpack.c.l.b16 %v554
      %v709 = vunpack.c.h.b16 %v554
      %v710 = vunpack.c.l.b16 %v555
      %v711 = vunpack.c.h.b16 %v555
      %v712 = vunpack.c.l.b16 %v556
      %v713 = vunpack.c.h.b16 %v556
      %v714 = vunpack.c.l.b16 %v557
      %v715 = vunpack.c.h.b16 %v557
      %v716 = vunpack.c.l.b16 %v558
      %v717 = vunpack.c.h.b16 %v558
      %v718 = vunpack.c.l.b16 %v559
      %v719 = vunpack.c.h.b16 %v559
      %v720 = vunpack.c.l.b16 %v560
      %v721 = vunpack.c.h.b16 %v560
      %v722 = vunpack.c.l.b16 %v561
      %v723 = vunpack.c.h.b16 %v561
      %v724 = vunpack.c.l.b16 %v562
      %v725 = vunpack.c.h.b16 %v562
      %v726 = vunpack.c.l.b16 %v563
      %v727 = vunpack.c.h.b16 %v563
      %v728 = vunpack.c.l.b16 %v564
      %v729 = vunpack.c.h.b16 %v564
      %v730 = vunpack.c.l.b16 %v565
      %v731 = vunpack.c.h.b16 %v565
      %v732 = vunpack.c.l.b16 %v566
      %v733 = vunpack.c.h.b16 %v566
      %v734 = vunpack.c.l.b16 %v567
      %v735 = vunpack.c.h.b16 %v567
      %v736 = vunpack.c.l.b16 %v568
      %v737 = vunpack.c.h.b16 %v568
      %v738 = vunpack.c.l.b16 %v569
      %v739 = vunpack.c.h.b16 %v569
      %v740 = vunpack.c.l.b16 %v570
      %v741 = vunpack.c.h.b16 %v570
      %v742 = vunpack.c.l.b16 %v571
      %v743 = vunpack.c.h.b16 %v571
      %v744 = vunpack.c.l.b16 %v572
      %v745 = vunpack.c.h.b16 %v572
      %v746 = vunpack.c.l.b16 %v573
      %v747 = vunpack.c.h.b16 %v573
      %v748 = vunpack.c.l.b16 %v574
      %v749 = vunpack.c.h.b16 %v574
      %v750 = vunpack.c.l.b16 %v575
      %v751 = vunpack.c.h.b16 %v575
      %v752 = vunpack.c.l.b16 %v576
      %v753 = vunpack.c.h.b16 %v576
      %v754 = vunpack.c.l.b16 %v577
      %v755 = vunpack.c.h.b16 %v577
      %v756 = vunpack.c.l.b16 %v578
      %v757 = vunpack.c.h.b16 %v578
      %v758 = vunpack.c.l.b16 %v579
      %v759 = vunpack.c.h.b16 %v579
      %v760 = vunpack.c.l.b16 %v580
      %v761 = vunpack.c.h.b16 %v580
      %v762 = vunpack.c.l.b16 %v581
      %v763 = vunpack.c.h.b16 %v581
      %v764 = vunpack.c.l.b16 %v582
      %v765 = vunpack.c.h.b16 %v582
      %v766 = vunpack.c.l.b16 %v583
      %v767 = vunpack.c.h.b16 %v583
      %v768 = vunpack.c.l.b16 %v584
      %v769 = vunpack.c.h.b16 %v584
      %v770 = vunpack.c.l.b16 %v585
      %v771 = vunpack.c.h.b16 %v585
      %v772 = vunpack.c.l.b16 %v586
      %v773 = vunpack.c.h.b16 %v586
      %v774 = vunpack.c.l.b16 %v587
      %v775 = vunpack.c.h.b16 %v587
      %v776 = vunpack.c.l.b16 %v588
      %v777 = vunpack.c.h.b16 %v588
      %v778 = vunpack.c.l.b16 %v589
      %v779 = vunpack.c.h.b16 %v589
      %v780 = vunpack.c.l.b16 %v590
      %v781 = vunpack.c.h.b16 %v590
      %v782 = vunpack.c.l.b16 %v591
      %v783 = vunpack.c.h.b16 %v591
      %v784 = vunpack.c.l.b16 %v592
      %v785 = vunpack.c.h.b16 %v592
      %v786 = vunpack.c.l.b16 %v593
      %v787 = vunpack.c.h.b16 %v593
      %v788 = vunpack.c.l.b16 %v594
      %v789 = vunpack.c.h.b16 %v594
      %v790 = vunpack.c.l.b16 %v595
      %v791 = vunpack.c.h.b16 %v595
      %v792 = vunpack.c.l.b16 %v596
      %v793 = vunpack.c.h.b16 %v596
      %v794 = vunpack.c.l.b16 %v597
      %v795 = vunpack.c.h.b16 %v597
      %v796 = vunpack.c.l.b16 %v598
      %v797 = vunpack.c.h.b16 %v598
      %v798 = vunpack.c.l.b16 %v599
      %v799 = vunpack.c.h.b16 %v599
      %v800 = vunpack.c.l.b16 %v600
      %v801 = vunpack.c.h.b16 %v600
      %v802 = vunpack.c.l.b16 %v601
      %v803 = vunpack.c.h.b16 %v601
      %v804 = vunpack.c.l.b16 %v602
      %v805 = vunpack.c.h.b16 %v602
      %v806 = vunpack.c.l.b16 %v603
      %v807 = vunpack.c.h.b16 %v603
      %v808 = vunpack.c.l.b16 %v604
      %v809 = vunpack.c.h.b16 %v604
      %v810 = vunpack.c.l.b16 %v605
      %v811 = vunpack.c.h.b16 %v605
      %v812 = vunpack.c.l.b16 %v606
      %v813 = vunpack.c.h.b16 %v606
      %v814 = vunpack.c.l.b16 %v607
      %v815 = vunpack.c.h.b16 %v607
      %v816 = vunpack.c.l.b16 %v608
      %v817 = vunpack.c.h.b16 %v608
      %v818 = vunpack.c.l.b16 %v609
      %v819 = vunpack.c.h.b16 %v609
      %v820 = vunpack.c.l.b16 %v610
      %v821 = vunpack.c.h.b16 %v610
      %v822 = vunpack.c.l.b16 %v611
      %v823 = vunpack.c.h.b16 %v611
      %v824 = vunpack.c.l.b16 %v612
      %v825 = vunpack.c.h.b16 %v612
      %v826 = vunpack.c.l.b16 %v613
      %v827 = vunpack.c.h.b16 %v613
      %v828 = vpack.c.b16 %v704, %v700
      %v829 = vpack.c.b16 %v705, %v701
      %v830 = vpack.c.b16 %v706, %v702
      %v831 = vpack.c.b16 %v707, %v703
      %v832 = vpack.c.b16 %v712, %v708
      %v833 = vpack.c.b16 %v713, %v709
      %v834 = vpack.c.b16 %v714, %v710
      %v835 = vpack.c.b16 %v715, %v711
      %v836 = vpack.c.b16 %v720, %v716
      %v837 = vpack.c.b16 %v721, %v717
      %v838 = vpack.c.b16 %v722, %v718
      %v839 = vpack.c.b16 %v723, %v719
      %v840 = vpack.c.b16 %v728, %v724
      %v841 = vpack.c.b16 %v729, %v725
      %v842 = vpack.c.b16 %v730, %v726
      %v843 = vpack.c.b16 %v731, %v727
      %v844 = vpack.c.b16 %v736, %v732
      %v845 = vpack.c.b16 %v737, %v733
      %v846 = vpack.c.b16 %v738, %v734
      %v847 = vpack.c.b16 %v739, %v735
      %v848 = vpack.c.b16 %v744, %v740
      %v849 = vpack.c.b16 %v745, %v741
      %v850 = vpack.c.b16 %v746, %v742
      %v851 = vpack.c.b16 %v747, %v743
      %v852 = vpack.c.b16 %v752, %v748
      %v853 = vpack.c.b16 %v753, %v749
      %v854 = vpack.c.b16 %v754, %v750
      %v855 = vpack.c.b16 %v755, %v751
      %v856 = vpack.c.b16 %v760, %v756
      %v857 = vpack.c.b16 %v761, %v757
      %v858 = vpack.c.b16 %v762, %v758
      %v859 = vpack.c.b16 %v763, %v759
      %v860 = vpack.c.b16 %v768, %v764
      %v861 = vpack.c.b16 %v769, %v765
      %v862 = vpack.c.b16 %v770, %v766
      %v863 = vpack.c.b16 %v771, %v767
      %v864 = vpack.c.b16 %v776, %v772
      %v865 = vpack.c.b16 %v777, %v773
      %v866 = vpack.c.b16 %v778, %v774
      %v867 = vpack.c.b16 %v779, %v775
      %v868 = vpack.c.b16 %v784, %v780
      %v869 = vpack.c.b16 %v785, %v781
      %v870 = vpack.c.b16 %v786, %v782
      %v871 = vpack.c.b16 %v787, %v783
      %v872 = vpack.c.b16 %v792, %v788
      %v873 = vpack.c.b16 %v793, %v789
      %v874 = vpack.c.b16 %v794, %v790
      %v875 = vpack.c.b16 %v795, %v791
      %v876 = vpack.c.b16 %v800, %v796
      %v877 = vpack.c.b16 %v801, %v797
      %v878 = vpack.c.b16 %v802, %v798
      %v879 = vpack.c.b16 %v803, %v799
      %v880 = vpack.c.b16 %v808, %v804
      %v881 = vpack.c.b16 %v809, %v805
      %v882 = vpack.c.b16 %v810, %v806
      %v883 = vpack.c.b16 %v811, %v807
      %v884 = vpack.c.b16 %v816, %v812
      %v885 = vpack.c.b16 %v817, %v813
      %v886 = vpack.c.b16 %v818, %v814
      %v887 = vpack.c.b16 %v819, %v815
      %v888 = vpack.c.b16 %v824, %v820
      %v889 = vpack.c.b16 %v825, %v821
      %v890 = vpack.c.b16 %v826, %v822
      %v891 = vpack.c.b16 %v827, %v823
      %956 = vmatprep.subr.bf16.mxu0 %v829
      %957 = vmatpush1.bf16.msra.mxu0 %v828
      %958 = vmatprep.subr.bf16.mxu0 %v833
      %959 = vmatpush1.bf16.msra.mxu0 %v832
      %960 = vmatprep.subr.bf16.mxu0 %v837
      %961 = vmatpush1.bf16.msra.mxu0 %v836
      %962 = vmatprep.subr.bf16.mxu0 %v841
      %963 = vmatpush1.bf16.msra.mxu0 %v840
      %964 = vmatprep.subr.bf16.mxu0 %v845
      %965 = vmatpush1.bf16.msra.mxu0 %v844
      %966 = vmatprep.subr.bf16.mxu0 %v849
      %967 = vmatpush1.bf16.msra.mxu0 %v848
      %968 = vmatprep.subr.bf16.mxu0 %v853
      %969 = vmatpush1.bf16.msra.mxu0 %v852
      %970 = vmatprep.subr.bf16.mxu0 %v857
      %971 = vmatpush1.bf16.msra.mxu0 %v856
      %972 = vmatprep.subr.bf16.mxu0 %v861
      %973 = vmatpush1.bf16.msra.mxu0 %v860
      %974 = vmatprep.subr.bf16.mxu0 %v865
      %975 = vmatpush1.bf16.msra.mxu0 %v864
      %976 = vmatprep.subr.bf16.mxu0 %v869
      %977 = vmatpush1.bf16.msra.mxu0 %v868
      %978 = vmatprep.subr.bf16.mxu0 %v873
      %979 = vmatpush1.bf16.msra.mxu0 %v872
      %980 = vmatprep.subr.bf16.mxu0 %v877
      %981 = vmatpush1.bf16.msra.mxu0 %v876
      %982 = vmatprep.subr.bf16.mxu0 %v881
      %983 = vmatpush1.bf16.msra.mxu0 %v880
      %984 = vmatprep.subr.bf16.mxu0 %v885
      %985 = vmatpush1.bf16.msra.mxu0 %v884
      %986 = vmatprep.subr.bf16.mxu0 %v889
      %987 = vmatpush1.bf16.msra.mxu0 %v888
      %988 = vmatprep.mubr.bf16.mxu0 %v549
      %989 = vmatmul.mubr.bf16.gmra.mrb[0].mxu0 %v548
      %v990 = vpop.f32.mrb[0].mxu0
      %v991 = vadd.f32 %v619, %v990
      %v992 = vpop.f32.mrb[0].mxu0
      %v993 = vadd.f32 %v623, %v992
      %v994 = vpop.f32.mrb[0].mxu0
      %v995 = vpop.f32.mrb[0].mxu0
      %996 = vdwg.mxu0
      %997 = vmatprep.subr.bf16.mxu0 %v831
      %998 = vmatpush1.bf16.msra.mxu0 %v830
      %999 = vmatprep.subr.bf16.mxu0 %v835
      %1000 = vmatpush1.bf16.msra.mxu0 %v834
      %1001 = vmatprep.subr.bf16.mxu0 %v839
      %1002 = vmatpush1.bf16.msra.mxu0 %v838
      %1003 = vmatprep.subr.bf16.mxu0 %v843
      %1004 = vmatpush1.bf16.msra.mxu0 %v842
      %1005 = vmatprep.subr.bf16.mxu0 %v847
      %1006 = vmatpush1.bf16.msra.mxu0 %v846
      %1007 = vmatprep.subr.bf16.mxu0 %v851
      %1008 = vmatpush1.bf16.msra.mxu0 %v850
      %1009 = vmatprep.subr.bf16.mxu0 %v855
      %1010 = vmatpush1.bf16.msra.mxu0 %v854
      %1011 = vmatprep.subr.bf16.mxu0 %v859
      %1012 = vmatpush1.bf16.msra.mxu0 %v858
      %1013 = vmatprep.subr.bf16.mxu0 %v863
      %1014 = vmatpush1.bf16.msra.mxu0 %v862
      %1015 = vmatprep.subr.bf16.mxu0 %v867
      %1016 = vmatpush1.bf16.msra.mxu0 %v866
      %1017 = vmatprep.subr.bf16.mxu0 %v871
      %1018 = vmatpush1.bf16.msra.mxu0 %v870
      %1019 = vmatprep.subr.bf16.mxu0 %v875
      %1020 = vmatpush1.bf16.msra.mxu0 %v874
      %1021 = vmatprep.subr.bf16.mxu0 %v879
      %1022 = vmatpush1.bf16.msra.mxu0 %v878
      %1023 = vmatprep.subr.bf16.mxu0 %v883
      %1024 = vmatpush1.bf16.msra.mxu0 %v882
      %1025 = vmatprep.subr.bf16.mxu0 %v887
      %1026 = vmatpush1.bf16.msra.mxu0 %v886
      %1027 = vmatprep.subr.bf16.mxu0 %v891
      %1028 = vmatpush1.bf16.msra.mxu0 %v890
      %1029 = vmatprep.mubr.bf16.mxu0 %v549
      %1030 = vmatmul.mubr.bf16.gmra.mrb[0].mxu0 %v548
      %v1031 = vpop.f32.mrb[0].mxu0
      %v1032 = vadd.f32 %v627, %v1031
      %v1033 = vpop.f32.mrb[0].mxu0
      %v1034 = vadd.f32 %v631, %v1033
      %v1035 = vpop.f32.mrb[0].mxu0
      %v1036 = vpop.f32.mrb[0].mxu0
      %1037 = vdwg.mxu0
      %v1038 = vld [vmem:[%s382] sm:$0x1]
      %v1039 = vld [vmem:[%s385] sm:$0x1]
      %vm1040 = vcmask 1041408
      %v1041 = vsel %vm1040, %v991, 0.0
      %1042 = vadd.xlane.f32.xlu0 %v1041
      %v1043 = vpop.xlane.xlu0 %1042
      %v1044 = vrcp.pop 128.0
      %v1045 = vmul.f32 %v1043, %v1044
      %v1046 = vsub.f32 %v991, %v1045
      %v1047 = vmul.f32 %v1046, %v1046
      %v1048 = vsel %vm1040, %v1047, 0.0
      %1049 = vadd.xlane.f32.xlu0 %v1048
      %v1050 = vpop.xlane.xlu0 %1049
      %v1051 = vmul.f32 %v1050, %v1044
      %v1052 = vadd.f32 %v1051, 1e-05
      %v1053 = vrsqrt.pop %v1052
      %v1054 = vmul.f32 %v1046, %v1053
      %v1056 = vlaneseq
      %v1057 = vshrl.u32 %v1056, 7
      %v1058 = vsub.s32 0, %v1057
      %v1059 = vrot.slane %v1038, %v1058
      %v1061 = vmul.f32 %v1054, %v1059
      %v1063 = vlaneseq
      %v1064 = vshrl.u32 %v1063, 7
      %v1065 = vsub.s32 0, %v1064
      %v1066 = vrot.slane %v1039, %v1065
      %v1068 = vadd.f32 %v1061, %v1066
      %1069 = vst [vmem:[%s394] sm:$0x3] %v1068
      %v1070 = vsel %vm1040, %v993, 0.0
      %1071 = vadd.xlane.f32.xlu0 %v1070
      %v1072 = vpop.xlane.xlu0 %1071
      %v1073 = vmul.f32 %v1072, %v1044
      %v1074 = vsub.f32 %v993, %v1073
      %v1075 = vmul.f32 %v1074, %v1074
      %v1076 = vsel %vm1040, %v1075, 0.0
      %1077 = vadd.xlane.f32.xlu0 %v1076
      %v1078 = vpop.xlane.xlu0 %1077
      %v1079 = vmul.f32 %v1078, %v1044
      %v1080 = vadd.f32 %v1079, 1e-05
      %v1081 = vrsqrt.pop %v1080
      %v1082 = vmul.f32 %v1074, %v1081
      %v1083 = vmul.f32 %v1082, %v1059
      %v1084 = vadd.f32 %v1083, %v1066
      %1085 = vst [vmem:[%s394 + $0x2] sm:$0x3] %v1084
      %v1086 = vsel %vm1040, %v1032, 0.0
      %1087 = vadd.xlane.f32.xlu0 %v1086
      %v1088 = vpop.xlane.xlu0 %1087
      %v1089 = vmul.f32 %v1088, %v1044
      %v1090 = vsub.f32 %v1032, %v1089
      %v1091 = vmul.f32 %v1090, %v1090
      %v1092 = vsel %vm1040, %v1091, 0.0
      %1093 = vadd.xlane.f32.xlu0 %v1092
      %v1094 = vpop.xlane.xlu0 %1093
      %v1095 = vmul.f32 %v1094, %v1044
      %v1096 = vadd.f32 %v1095, 1e-05
      %v1097 = vrsqrt.pop %v1096
      %v1098 = vmul.f32 %v1090, %v1097
      %v1099 = vmul.f32 %v1098, %v1059
      %v1100 = vadd.f32 %v1099, %v1066
      %1101 = vst [vmem:[%s394 + $0x4] sm:$0x3] %v1100
      %v1102 = vsel %vm1040, %v1034, 0.0
      %1103 = vadd.xlane.f32.xlu0 %v1102
      %v1104 = vpop.xlane.xlu0 %1103
      %v1105 = vmul.f32 %v1104, %v1044
      %v1106 = vsub.f32 %v1034, %v1105
      %v1107 = vmul.f32 %v1106, %v1106
      %v1108 = vsel %vm1040, %v1107, 0.0
      %1109 = vadd.xlane.f32.xlu0 %v1108
      %v1110 = vpop.xlane.xlu0 %1109
      %v1111 = vmul.f32 %v1110, %v1044
      %v1112 = vadd.f32 %v1111, 1e-05
      %v1113 = vrsqrt.pop %v1112
      %v1114 = vmul.f32 %v1106, %v1113
      %v1115 = vmul.f32 %v1114, %v1059
      %v1116 = vadd.f32 %v1115, %v1066
      %1117 = vst [vmem:[%s394 + $0x6] sm:$0x3] %v1116
      %s1118 = smul.u32 4, %s23
      %p1119 = scmp.lt.s32.totalorder %s22, 1
      %s1120 = scalar_select %p1119, %s22, 1
      %p1121 = scmp.lt.s32.totalorder %s1118, 3
      %s1122 = scalar_select %p1121, %s1118, 3
      %s1123 = smul.addr %s1120, 4
      %s1124 = sadd.s32 %s1122, %s1123
      %s1125 = smul.addr %s1124, 2
      %s1126 = scalar_lea.vmem %s7, %s1125
      // Predicated region
      $region49: #{projector_forward.1} parent=47 // pred_check
        %p1127 = pneg %p226
      $region50: #{projector_forward.1} parent=47 // pred_check_branch
        %1129 = sbr.rel (%p1127) target = $region52
      $region51: #{projector_forward.1} parent=47 // pred_region
        %s1130 = smul.u32 4, %s23
      $region52: #{projector_forward.1} parent=47 // pred_fallthru
        _
    $region48: #{projector_forward.1} parent=5 // pred_fallthru
      _
    %p1131 = scmp.le.s32.totalorder 2, %s13
    // Predicated region
    $region53: #{projector_forward.1} parent=5 // pred_check
      %p1132 = pneg %p1131
    $region54: #{projector_forward.1} parent=5 // pred_check_branch
      %1134 = sbr.rel (%p1132) target = $region56
    $region55: #{projector_forward.1} parent=5 // pred_region
      %s1135 = ssub.s32 %s13, 2
      // Predicated region
      $region57: #{projector_forward.1} parent=55 // pred_check
        %p1136 = pneg %p232
      $region58: #{projector_forward.1} parent=55 // pred_check_branch
        %1138 = sbr.rel (%p1136) target = $region60
      $region59: #{projector_forward.1} parent=55 // pred_region
        %s1139 = smul.u32 4, %s25
        %p1140 = scmp.lt.s32.totalorder %s24, 1
        %s1141 = scalar_select %p1140, %s24, 1
        %p1142 = scmp.lt.s32.totalorder %s1139, 3
        %s1143 = scalar_select %p1142, %s1139, 3
        %s1144 = smul.addr %s1141, 4
        %s1145 = sadd.s32 %s1143, %s1144
        %s1146 = smul.addr %s1145, 2
        %s1147 = scalar_lea.vmem %s7, %s1146
      $region60: #{projector_forward.1} parent=55 // pred_fallthru
        _
    $region56: #{projector_forward.1} parent=5 // pred_fallthru
      _
  $region6: #{projector_forward.1} parent=0 // loop_footer
    %s17 = sadd.s32 1, %s13
  $region7: #{projector_forward.1} parent=0 // loop_footer_branch
    %12 = sbr.rel target = $region3
  $region8: #{projector_forward.1} parent=0 // loop_exit
    _

</llo_original>
